<compile_context>
chip_gen: v6e
topology: v6e:2x2x1
jax: 0.10.0
libtpu: 0.0.40
codegen_flags: <defaults>
</compile_context>

<pallas_src>
import functools

import jax
import jax.numpy as jnp
from jax.experimental import pallas as pl
from jax.experimental.pallas import tpu as pltpu

IN_FEAT = 8       # in_feat  (node feature size)
OUT_FEAT = 32     # out_feat (SAGEConv output size)

MIN_TILE = 256                      # multiple of the (32,128) int8 / (8,128) f32 tiles
TM_CAP = 1024                       # row-tile cap
MAX_A_TILE_ELEMS = 2 * 1024 * 1024  # TM*TK cap: 2 MiB int8 x2 bufs + 8 MiB f32 cast temp
VMEM_LIMIT_BYTES = 32 << 20         # explicit scoped-VMEM limit (headroom over ~18 MiB use)


def sage_strip_kernel(a_ref, hn_ref, hs_ref, dinv_ref, wn_ref, ws_ref, b_ref,
                      out_ref):
    """Single-pass variant: a full row strip of A is VMEM-resident (no k axis).

    a_ref   : [TM, N]  int8   raw in-edge counts (dst-row strip of A)
    hn_ref  : [N, F]   f32    all node features (aggregation operand)
    hs_ref  : [TM, F]  f32    node features of this row tile (self term)
    dinv_ref: [TM, 1]  f32    1/in_degree (0 for nodes with no in-edges)
    wn_ref  : [F, E]   f32    neighbor half of Linear weight (W.T[F:])
    ws_ref  : [F, E]   f32    self half of Linear weight (W.T[:F])
    b_ref   : [1, E]   f32    bias
    out_ref : [TM, E]  f32
    """
    counts = a_ref[...].astype(jnp.float32)          # exact: counts are small ints
    agg = jnp.dot(counts, hn_ref[...], preferred_element_type=jnp.float32)
    h_n = agg * dinv_ref[...]                        # mean over in-neighbors
    out_ref[...] = (
        jnp.dot(hs_ref[...], ws_ref[...], preferred_element_type=jnp.float32)
        + jnp.dot(h_n, wn_ref[...], preferred_element_type=jnp.float32)
        + b_ref[...]
    )


def sage_kred_kernel(a_ref, hk_ref, hs_ref, dinv_ref, wn_ref, ws_ref, b_ref,
                     out_ref, acc_ref):
    """k-reduced variant for graphs whose A row strip does not fit the VMEM budget.

    a_ref  : [TM, TK] int8, hk_ref : [TK, F] f32, acc_ref : [TM, F] f32 scratch.
    Output rows stay resident across the k axis ('arbitrary' reduction axis).
    """
    k = pl.program_id(1)

    @pl.when(k == 0)
    def _():
        acc_ref[...] = jnp.zeros_like(acc_ref)

    # Aggregate-before-project: the N^2-scaling matmul runs at width F (not E).
    acc_ref[...] += jnp.dot(a_ref[...].astype(jnp.float32), hk_ref[...],
                            preferred_element_type=jnp.float32)

    @pl.when(k == pl.num_programs(1) - 1)
    def _():
        h_n = acc_ref[...] * dinv_ref[...]
        out_ref[...] = (
            jnp.dot(hs_ref[...], ws_ref[...], preferred_element_type=jnp.float32)
            + jnp.dot(h_n, wn_ref[...], preferred_element_type=jnp.float32)
            + b_ref[...]
        )


def build_count_adj(edge_index, num_nodes_padded):
    """A[i, j] = (#edges j -> i) as int8 counts; deg_inv[i] = 1/in_degree(i) (or 0).

    Matches DGL update_all(copy_u('h','m'), mean('m','h_N')): messages flow
    src -> dst, multi-edges count with multiplicity, isolated nodes get h_N = 0.
    Counts fit int8 for any realistic multigraph (per-pair multiplicity < 128).
    """
    src = edge_index[0]
    dst = edge_index[1]
    a = jnp.zeros((num_nodes_padded, num_nodes_padded), jnp.float32)
    a = a.at[dst, src].add(1.0)
    deg = jnp.sum(a, axis=1, keepdims=True)
    deg_inv = jnp.where(deg > 0, 1.0 / deg, 0.0)     # guard empty rows (no inf/nan)
    return a.astype(jnp.int8), deg_inv


def init_params(key, in_feat, out_feat):
    """PyTorch nn.Linear(2*in_feat, out_feat) default init, stored as W.T halves."""
    k1, k2 = jax.random.split(key)
    bound = 1.0 / jnp.sqrt(2.0 * in_feat)
    w_t = jax.random.uniform(k1, (2 * in_feat, out_feat), jnp.float32, -bound, bound)
    b = jax.random.uniform(k2, (1, out_feat), jnp.float32, -bound, bound)
    w_self = w_t[:in_feat]     # multiplies h      (first half of the concat)
    w_neigh = w_t[in_feat:]    # multiplies h_N    (second half of the concat)
    return w_self, w_neigh, b


def _largest_divisor_tile(n_pad, cap):
    """Largest multiple-of-MIN_TILE divisor of n_pad that is <= cap."""
    best = MIN_TILE
    t = MIN_TILE
    while t <= min(cap, n_pad):
        if n_pad % t == 0:
            best = t
        t += MIN_TILE
    return best


def _choose_tiles(n_pad):
    """Pick (TM, TK).  TK == n_pad means the k grid axis is collapsed."""
    tm = _largest_divisor_tile(n_pad, TM_CAP)
    # Megacore: keep >= 2 row tiles when the graph allows it (v7x has 2 TCs).
    if n_pad // tm < 2 and n_pad > MIN_TILE:
        tm = _largest_divisor_tile(n_pad, n_pad // 2)
    tk_cap = max(MIN_TILE, MAX_A_TILE_ELEMS // tm)
    if n_pad <= tk_cap:
        return tm, n_pad
    return tm, _largest_divisor_tile(n_pad, tk_cap)


@functools.partial(jax.jit, static_argnames=("num_nodes",))
def sage_conv_forward(h, edge_index, w_self, w_neigh, b, *, num_nodes):
    n = num_nodes
    f = h.shape[1]
    e = w_self.shape[1]

    # Pad the node count so the grid axes divide evenly; padded rows have zero
    # counts / zero deg_inv and are sliced off at the end.
    n_pad = MIN_TILE * pl.cdiv(n, MIN_TILE)
    h_pad = jnp.zeros((n_pad, f), jnp.float32).at[:n].set(h.astype(jnp.float32))
    a_i8, deg_inv = build_count_adj(edge_index, n_pad)

    tm, tk = _choose_tiles(n_pad)

    cost = pl.CostEstimate(
        flops=2 * n_pad * n_pad * f + 4 * n_pad * f * e + n_pad * f,
        transcendentals=0,
        bytes_accessed=(n_pad * n_pad                 # int8 adjacency (quadratic term)
                        + 2 * n_pad * f * 4           # h (aggregation + self streams)
                        + n_pad * 4                   # deg_inv
                        + 2 * f * e * 4 + e * 4       # weights + bias
                        + n_pad * e * 4),             # output
    )

    if tk == n_pad:
        # Full row strip of A per step -> no reduction axis, no accumulator.
        grid_spec = pltpu.PrefetchScalarGridSpec(
            num_scalar_prefetch=0,
            grid=(n_pad // tm,),
            in_specs=[
                pl.BlockSpec((tm, n_pad), lambda i: (i, 0)),   # A row strip (int8)
                pl.BlockSpec((n_pad, f), lambda i: (0, 0)),    # all h (aggregation)
                pl.BlockSpec((tm, f), lambda i: (i, 0)),       # h (self rows)
                pl.BlockSpec((tm, 1), lambda i: (i, 0)),       # 1/in_degree
                pl.BlockSpec((f, e), lambda i: (0, 0)),        # W_neigh
                pl.BlockSpec((f, e), lambda i: (0, 0)),        # W_self
                pl.BlockSpec((1, e), lambda i: (0, 0)),        # bias
            ],
            out_specs=pl.BlockSpec((tm, e), lambda i: (i, 0)),
        )
        kernel = sage_strip_kernel
        dims = ("parallel",)
    else:
        # k-reduced path for large graphs: A tiles capped so int8 double buffers
        # plus the in-kernel f32 cast temp stay within the VMEM limit.
        grid_spec = pltpu.PrefetchScalarGridSpec(
            num_scalar_prefetch=0,
            grid=(n_pad // tm, n_pad // tk),
            in_specs=[
                pl.BlockSpec((tm, tk), lambda i, k: (i, k)),   # A tile (int8)
                pl.BlockSpec((tk, f), lambda i, k: (k, 0)),    # h (neighbor side)
                pl.BlockSpec((tm, f), lambda i, k: (i, 0)),    # h (self side)
                pl.BlockSpec((tm, 1), lambda i, k: (i, 0)),    # 1/in_degree
                pl.BlockSpec((f, e), lambda i, k: (0, 0)),     # W_neigh
                pl.BlockSpec((f, e), lambda i, k: (0, 0)),     # W_self
                pl.BlockSpec((1, e), lambda i, k: (0, 0)),     # bias
            ],
            out_specs=pl.BlockSpec((tm, e), lambda i, k: (i, 0)),
            scratch_shapes=[pltpu.VMEM((tm, f), jnp.float32)],
        )
        kernel = sage_kred_kernel
        dims = ("parallel", "arbitrary")

    out_pad = pl.pallas_call(
        kernel,
        out_shape=jax.ShapeDtypeStruct((n_pad, e), jnp.float32),
        grid_spec=grid_spec,
        compiler_params=pltpu.CompilerParams(
            dimension_semantics=dims,
            vmem_limit_bytes=VMEM_LIMIT_BYTES),
        cost_estimate=cost,
    )(a_i8, h_pad, h_pad, deg_inv, w_neigh, w_self, b)

    return out_pad[:n]


if __name__ == "__main__":
    # Small deterministic example: 16 nodes in two 8-node components, 24 edges.
    N = 16
    E_PER_GRAPH = 12

    key = jax.random.PRNGKey(0)
    kx, ke0, ke1, kp = jax.random.split(key, 4)

    h = jax.random.normal(kx, (N, IN_FEAT), jnp.float32)
    e0 = jax.random.randint(ke0, (2, E_PER_GRAPH), 0, 8)
    e1 = jax.random.randint(ke1, (2, E_PER_GRAPH), 8, 16)
    edge_index = jnp.concatenate([e0, e1], axis=1).astype(jnp.int32)   # [2, 24]

    w_self, w_neigh, b = init_params(kp, IN_FEAT, OUT_FEAT)

    out = sage_conv_forward(h, edge_index, w_self, w_neigh, b, num_nodes=N)
    jax.block_until_ready(out)

    # Pure-JAX reference of the same SAGEConv forward (f32 end-to-end).
    a_cnt, dinv = build_count_adj(edge_index, N)
    h_n_ref = (a_cnt.astype(jnp.float32) @ h) * dinv
    ref = h @ w_self + h_n_ref @ w_neigh + b     # == concat([h, h_N]) @ W.T + b

    assert out.shape == (N, OUT_FEAT)
    assert bool(jnp.all(jnp.isfinite(out)))
    assert bool(jnp.allclose(out, ref, rtol=1e-4, atol=1e-4)), \
        float(jnp.max(jnp.abs(out - ref)))
    print("KERNEL_OK")
</pallas_src>

<mosaic_0001>
module attributes {stable_mosaic.version = 11 : i64} {
  func.func private @main(%arg0: i32) attributes {dimension_semantics = [#tpu.dimension_semantics<core_parallel>], iteration_bounds = array<i64: 2>, tpu.core_type = #tpu.core_type<sc_scalar_subcore>, window_params = []} {
    return
  }
}

module attributes {stable_mosaic.version = 11 : i64} {
  func.func private @main(%arg0: i32) attributes {dimension_semantics = [#tpu.dimension_semantics<core_parallel>], iteration_bounds = array<i64: 2>, tpu.core_type = #tpu.core_type<sc_scalar_subcore>, window_params = []} {
    return
  }
}

module attributes {stable_mosaic.version = 11 : i64} {
  func.func @sage_strip_kernel(%arg0: i32, %arg1: memref<256x256xi8, #tpu.memory_space<vmem>>, %arg2: memref<256x8xf32, #tpu.memory_space<vmem>>, %arg3: memref<256x8xf32, #tpu.memory_space<vmem>>, %arg4: memref<256x1xf32, #tpu.memory_space<vmem>>, %arg5: memref<8x32xf32, #tpu.memory_space<vmem>>, %arg6: memref<8x32xf32, #tpu.memory_space<vmem>>, %arg7: memref<1x32xf32, #tpu.memory_space<vmem>>, %arg8: memref<256x32xf32, #tpu.memory_space<vmem>>) attributes {dimension_semantics = [#tpu.dimension_semantics<parallel>], iteration_bounds = array<i64: 1>, scalar_prefetch = 0 : i64, scratch_operands = 0 : i64, tpu.core_type = #tpu.core_type<tc>, window_params = [{transform_indices = @transform_0, window_bounds = array<i64: 256, 256>}, {pipeline_mode = #tpu.pipeline_mode<synchronous>, transform_indices = @transform_1, window_bounds = array<i64: 256, 8>}, {transform_indices = @transform_2, window_bounds = array<i64: 256, 8>}, {transform_indices = @transform_3, window_bounds = array<i64: 256, 1>}, {pipeline_mode = #tpu.pipeline_mode<synchronous>, transform_indices = @transform_4, window_bounds = array<i64: 8, 32>}, {pipeline_mode = #tpu.pipeline_mode<synchronous>, transform_indices = @transform_5, window_bounds = array<i64: 8, 32>}, {pipeline_mode = #tpu.pipeline_mode<synchronous>, transform_indices = @transform_6, window_bounds = array<i64: 1, 32>}, {transform_indices = @transform_7, window_bounds = array<i64: 256, 32>}]} {
    %c0 = arith.constant 0 : index
    %c0_0 = arith.constant 0 : index
    %0 = vector.load %arg1[%c0, %c0_0] : memref<256x256xi8, #tpu.memory_space<vmem>>, vector<256x256xi8>
    %1 = arith.sitofp %0 : vector<256x256xi8> to vector<256x256xf32>
    %c0_1 = arith.constant 0 : index
    %c0_2 = arith.constant 0 : index
    %2 = vector.load %arg2[%c0_1, %c0_2] : memref<256x8xf32, #tpu.memory_space<vmem>>, vector<256x8xf32>
    %cst = arith.constant dense<0.000000e+00> : vector<256x8xf32>
    %3 = tpu.matmul %1, %2, %cst {dimension_numbers = #tpu.dot_dimension_numbers<[1], [0], [0], [1], [0, 0, 1, 1], [], []>} : vector<256x256xf32>, vector<256x8xf32>, vector<256x8xf32> -> vector<256x8xf32>
    %c0_3 = arith.constant 0 : index
    %c0_4 = arith.constant 0 : index
    %4 = vector.load %arg4[%c0_3, %c0_4] : memref<256x1xf32, #tpu.memory_space<vmem>>, vector<256x1xf32>
    %5 = vector.broadcast %4 : vector<256x1xf32> to vector<256x8xf32>
    %6 = arith.mulf %3, %5 : vector<256x8xf32>
    %c0_5 = arith.constant 0 : index
    %c0_6 = arith.constant 0 : index
    %7 = vector.load %arg3[%c0_5, %c0_6] : memref<256x8xf32, #tpu.memory_space<vmem>>, vector<256x8xf32>
    %c0_7 = arith.constant 0 : index
    %c0_8 = arith.constant 0 : index
    %8 = vector.load %arg6[%c0_7, %c0_8] : memref<8x32xf32, #tpu.memory_space<vmem>>, vector<8x32xf32>
    %cst_9 = arith.constant dense<0.000000e+00> : vector<256x32xf32>
    %9 = tpu.matmul %7, %8, %cst_9 {dimension_numbers = #tpu.dot_dimension_numbers<[1], [0], [0], [1], [0, 0, 1, 1], [], []>} : vector<256x8xf32>, vector<8x32xf32>, vector<256x32xf32> -> vector<256x32xf32>
    %c0_10 = arith.constant 0 : index
    %c0_11 = arith.constant 0 : index
    %10 = vector.load %arg5[%c0_10, %c0_11] : memref<8x32xf32, #tpu.memory_space<vmem>>, vector<8x32xf32>
    %cst_12 = arith.constant dense<0.000000e+00> : vector<256x32xf32>
    %11 = tpu.matmul %6, %10, %cst_12 {dimension_numbers = #tpu.dot_dimension_numbers<[1], [0], [0], [1], [0, 0, 1, 1], [], []>} : vector<256x8xf32>, vector<8x32xf32>, vector<256x32xf32> -> vector<256x32xf32>
    %12 = arith.addf %9, %11 : vector<256x32xf32>
    %c0_13 = arith.constant 0 : index
    %c0_14 = arith.constant 0 : index
    %13 = vector.load %arg7[%c0_13, %c0_14] : memref<1x32xf32, #tpu.memory_space<vmem>>, vector<1x32xf32>
    %14 = vector.broadcast %13 : vector<1x32xf32> to vector<256x32xf32>
    %15 = arith.addf %12, %14 : vector<256x32xf32>
    %c0_15 = arith.constant 0 : index
    %c0_16 = arith.constant 0 : index
    %16 = vector.load %arg8[%c0_15, %c0_16] : memref<256x32xf32, #tpu.memory_space<vmem>>, vector<256x32xf32>
    tpu.vector_store %arg8[%c0_15, %c0_16], %15 {strides = array<i32>} : memref<256x32xf32, #tpu.memory_space<vmem>>, vector<256x32xf32>,
    return
  }
  func.func @transform_0(%arg0: i32) -> (i32, i32) {
    %c0_i32 = arith.constant 0 : i32
    %c0_i32_0 = arith.constant 0 : i32
    return %arg0, %c0_i32 : i32, i32
  }
  func.func @transform_1(%arg0: i32) -> (i32, i32) {
    %c0_i32 = arith.constant 0 : i32
    %c0_i32_0 = arith.constant 0 : i32
    %c0_i32_1 = arith.constant 0 : i32
    return %c0_i32, %c0_i32_0 : i32, i32
  }
  func.func @transform_2(%arg0: i32) -> (i32, i32) {
    %c0_i32 = arith.constant 0 : i32
    %c0_i32_0 = arith.constant 0 : i32
    return %arg0, %c0_i32 : i32, i32
  }
  func.func @transform_3(%arg0: i32) -> (i32, i32) {
    %c0_i32 = arith.constant 0 : i32
    %c0_i32_0 = arith.constant 0 : i32
    return %arg0, %c0_i32 : i32, i32
  }
  func.func @transform_4(%arg0: i32) -> (i32, i32) {
    %c0_i32 = arith.constant 0 : i32
    %c0_i32_0 = arith.constant 0 : i32
    %c0_i32_1 = arith.constant 0 : i32
    return %c0_i32, %c0_i32_0 : i32, i32
  }
  func.func @transform_5(%arg0: i32) -> (i32, i32) {
    %c0_i32 = arith.constant 0 : i32
    %c0_i32_0 = arith.constant 0 : i32
    %c0_i32_1 = arith.constant 0 : i32
    return %c0_i32, %c0_i32_0 : i32, i32
  }
  func.func @transform_6(%arg0: i32) -> (i32, i32) {
    %c0_i32 = arith.constant 0 : i32
    %c0_i32_0 = arith.constant 0 : i32
    %c0_i32_1 = arith.constant 0 : i32
    return %c0_i32, %c0_i32_0 : i32, i32
  }
  func.func @transform_7(%arg0: i32) -> (i32, i32) {
    %c0_i32 = arith.constant 0 : i32
    %c0_i32_0 = arith.constant 0 : i32
    return %arg0, %c0_i32 : i32, i32
  }
}

</mosaic_0001>

<llo_original>
// kernel: sage_conv_forward.1
$region0: #{sage_conv_forward.1}
  #allocation0 [shape = 'u32[]', space=smem, size = 0x4, offset = 0x4, fixed_abs, tag = 'smem constant byte address 0x4 - core index']
  #allocation1 [shape = 'u32[144,128]{1,0:T(1,128)}', space=vmem, size = 0x12000, scoped, tag = 'internal scratch']
  %s0 = inlined_call_operand.vmem [shape: s8[256,256], index: 0, kind: input, shape index: {}]
  %s1 = inlined_call_operand.vmem [shape: f32[256,8], index: 1, kind: input, shape index: {}, may-alias: {1,2}]
  %s2 = inlined_call_operand.vmem [shape: f32[256,8], index: 2, kind: input, shape index: {}, may-alias: {1,2}]
  %s3 = inlined_call_operand.vmem [shape: f32[256,1], index: 3, kind: input, shape index: {}]
  %s4 = inlined_call_operand.vmem [shape: f32[8,32], index: 4, kind: input, shape index: {}]
  %s5 = inlined_call_operand.vmem [shape: f32[8,32], index: 5, kind: input, shape index: {}]
  %s6 = inlined_call_operand.vmem [shape: f32[1,32], index: 6, kind: input, shape index: {}]
  %s7 = inlined_call_operand.vmem [shape: f32[256,32], index: 7, kind: output, shape index: {}]
  %s8 = sld [smem:[#allocation0]]
  $region38: #{sage_conv_forward.1} parent=0
    _
  %s10 = ssub.s32 1, %s8
  %s11 = scalar_select 0, %s10, %s8
  // Predicated region
  $region2: #{sage_conv_forward.1} parent=0 // pred_check
    _
  $region3: #{sage_conv_forward.1} parent=0 // pred_check_branch
    %13 = sbr.rel (0) target = $region5
  $region4: #{sage_conv_forward.1} parent=0 // pred_region
    _
  $region5: #{sage_conv_forward.1} parent=0 // pred_fallthru
    _
  // Predicated region
  $region6: #{sage_conv_forward.1} parent=0 // pred_check
    _
  $region7: #{sage_conv_forward.1} parent=0 // pred_check_branch
    %15 = sbr.rel (0) target = $region9
  $region8: #{sage_conv_forward.1} parent=0 // pred_region
    _
  $region9: #{sage_conv_forward.1} parent=0 // pred_fallthru
    _
  // Predicated region
  $region10: #{sage_conv_forward.1} parent=0 // pred_check
    _
  $region11: #{sage_conv_forward.1} parent=0 // pred_check_branch
    %17 = sbr.rel (0) target = $region13
  $region12: #{sage_conv_forward.1} parent=0 // pred_region
    _
  $region13: #{sage_conv_forward.1} parent=0 // pred_fallthru
    _
  // Predicated region
  $region14: #{sage_conv_forward.1} parent=0 // pred_check
    _
  $region15: #{sage_conv_forward.1} parent=0 // pred_check_branch
    %19 = sbr.rel (0) target = $region17
  $region16: #{sage_conv_forward.1} parent=0 // pred_region
    _
  $region17: #{sage_conv_forward.1} parent=0 // pred_fallthru
    _
  // Predicated region
  $region18: #{sage_conv_forward.1} parent=0 // pred_check
    _
  $region19: #{sage_conv_forward.1} parent=0 // pred_check_branch
    %21 = sbr.rel (0) target = $region21
  $region20: #{sage_conv_forward.1} parent=0 // pred_region
    _
  $region21: #{sage_conv_forward.1} parent=0 // pred_fallthru
    _
  // Predicated region
  $region22: #{sage_conv_forward.1} parent=0 // pred_check
    _
  $region23: #{sage_conv_forward.1} parent=0 // pred_check_branch
    %23 = sbr.rel (0) target = $region25
  $region24: #{sage_conv_forward.1} parent=0 // pred_region
    _
  $region25: #{sage_conv_forward.1} parent=0 // pred_fallthru
    _
  // Predicated region
  $region26: #{sage_conv_forward.1} parent=0 // pred_check
    _
  $region27: #{sage_conv_forward.1} parent=0 // pred_check_branch
    %25 = sbr.rel (0) target = $region29
  $region28: #{sage_conv_forward.1} parent=0 // pred_region
    _
  $region29: #{sage_conv_forward.1} parent=0 // pred_fallthru
    _
  %v26 = vld [vmem:[%s0] sm:$0xff]
  %v27 = vld [vmem:[%s0 + $0x8] sm:$0xff]
  %v28 = vld [vmem:[%s0 + $0x10] sm:$0xff]
  %v29 = vld [vmem:[%s0 + $0x18] sm:$0xff]
  %v30 = vld [vmem:[%s0 + $0x20] sm:$0xff]
  %v31 = vld [vmem:[%s0 + $0x28] sm:$0xff]
  %v32 = vld [vmem:[%s0 + $0x30] sm:$0xff]
  %v33 = vld [vmem:[%s0 + $0x38] sm:$0xff]
  %v34 = vld [vmem:[%s0 + $0x40] sm:$0xff]
  %v35 = vld [vmem:[%s0 + $0x48] sm:$0xff]
  %v36 = vld [vmem:[%s0 + $0x50] sm:$0xff]
  %v37 = vld [vmem:[%s0 + $0x58] sm:$0xff]
  %v38 = vld [vmem:[%s0 + $0x60] sm:$0xff]
  %v39 = vld [vmem:[%s0 + $0x68] sm:$0xff]
  %v40 = vld [vmem:[%s0 + $0x70] sm:$0xff]
  %v41 = vld [vmem:[%s0 + $0x78] sm:$0xff]
  %v42 = vunpack.c.0.s8 %v26
  %v43 = vunpack.c.0.s8 %v27
  %v44 = vunpack.c.1.s8 %v26
  %v45 = vunpack.c.1.s8 %v27
  %v46 = vunpack.c.2.s8 %v26
  %v47 = vunpack.c.2.s8 %v27
  %v48 = vunpack.c.3.s8 %v26
  %v49 = vunpack.c.3.s8 %v27
  %v50 = vunpack.c.0.s8 %v28
  %v51 = vunpack.c.0.s8 %v29
  %v52 = vunpack.c.1.s8 %v28
  %v53 = vunpack.c.1.s8 %v29
  %v54 = vunpack.c.2.s8 %v28
  %v55 = vunpack.c.2.s8 %v29
  %v56 = vunpack.c.3.s8 %v28
  %v57 = vunpack.c.3.s8 %v29
  %v58 = vunpack.c.0.s8 %v30
  %v59 = vunpack.c.0.s8 %v31
  %v60 = vunpack.c.1.s8 %v30
  %v61 = vunpack.c.1.s8 %v31
  %v62 = vunpack.c.2.s8 %v30
  %v63 = vunpack.c.2.s8 %v31
  %v64 = vunpack.c.3.s8 %v30
  %v65 = vunpack.c.3.s8 %v31
  %v66 = vunpack.c.0.s8 %v32
  %v67 = vunpack.c.0.s8 %v33
  %v68 = vunpack.c.1.s8 %v32
  %v69 = vunpack.c.1.s8 %v33
  %v70 = vunpack.c.2.s8 %v32
  %v71 = vunpack.c.2.s8 %v33
  %v72 = vunpack.c.3.s8 %v32
  %v73 = vunpack.c.3.s8 %v33
  %v74 = vunpack.c.0.s8 %v34
  %v75 = vunpack.c.0.s8 %v35
  %v76 = vunpack.c.1.s8 %v34
  %v77 = vunpack.c.1.s8 %v35
  %v78 = vunpack.c.2.s8 %v34
  %v79 = vunpack.c.2.s8 %v35
  %v80 = vunpack.c.3.s8 %v34
  %v81 = vunpack.c.3.s8 %v35
  %v82 = vunpack.c.0.s8 %v36
  %v83 = vunpack.c.0.s8 %v37
  %v84 = vunpack.c.1.s8 %v36
  %v85 = vunpack.c.1.s8 %v37
  %v86 = vunpack.c.2.s8 %v36
  %v87 = vunpack.c.2.s8 %v37
  %v88 = vunpack.c.3.s8 %v36
  %v89 = vunpack.c.3.s8 %v37
  %v90 = vunpack.c.0.s8 %v38
  %v91 = vunpack.c.0.s8 %v39
  %v92 = vunpack.c.1.s8 %v38
  %v93 = vunpack.c.1.s8 %v39
  %v94 = vunpack.c.2.s8 %v38
  %v95 = vunpack.c.2.s8 %v39
  %v96 = vunpack.c.3.s8 %v38
  %v97 = vunpack.c.3.s8 %v39
  %v98 = vunpack.c.0.s8 %v40
  %v99 = vunpack.c.0.s8 %v41
  %v100 = vunpack.c.1.s8 %v40
  %v101 = vunpack.c.1.s8 %v41
  %v102 = vunpack.c.2.s8 %v40
  %v103 = vunpack.c.2.s8 %v41
  %v104 = vunpack.c.3.s8 %v40
  %v105 = vunpack.c.3.s8 %v41
  %v106 = vcvt.s32.f32 %v42
  %v107 = vcvt.s32.f32 %v43
  %v108 = vcvt.s32.f32 %v44
  %v109 = vcvt.s32.f32 %v45
  %v110 = vcvt.s32.f32 %v46
  %v111 = vcvt.s32.f32 %v47
  %v112 = vcvt.s32.f32 %v48
  %v113 = vcvt.s32.f32 %v49
  %v114 = vcvt.s32.f32 %v50
  %v115 = vcvt.s32.f32 %v51
  %v116 = vcvt.s32.f32 %v52
  %v117 = vcvt.s32.f32 %v53
  %v118 = vcvt.s32.f32 %v54
  %v119 = vcvt.s32.f32 %v55
  %v120 = vcvt.s32.f32 %v56
  %v121 = vcvt.s32.f32 %v57
  %v122 = vcvt.s32.f32 %v58
  %v123 = vcvt.s32.f32 %v59
  %v124 = vcvt.s32.f32 %v60
  %v125 = vcvt.s32.f32 %v61
  %v126 = vcvt.s32.f32 %v62
  %v127 = vcvt.s32.f32 %v63
  %v128 = vcvt.s32.f32 %v64
  %v129 = vcvt.s32.f32 %v65
  %v130 = vcvt.s32.f32 %v66
  %v131 = vcvt.s32.f32 %v67
  %v132 = vcvt.s32.f32 %v68
  %v133 = vcvt.s32.f32 %v69
  %v134 = vcvt.s32.f32 %v70
  %v135 = vcvt.s32.f32 %v71
  %v136 = vcvt.s32.f32 %v72
  %v137 = vcvt.s32.f32 %v73
  %v138 = vcvt.s32.f32 %v74
  %v139 = vcvt.s32.f32 %v75
  %v140 = vcvt.s32.f32 %v76
  %v141 = vcvt.s32.f32 %v77
  %v142 = vcvt.s32.f32 %v78
  %v143 = vcvt.s32.f32 %v79
  %v144 = vcvt.s32.f32 %v80
  %v145 = vcvt.s32.f32 %v81
  %v146 = vcvt.s32.f32 %v82
  %v147 = vcvt.s32.f32 %v83
  %v148 = vcvt.s32.f32 %v84
  %v149 = vcvt.s32.f32 %v85
  %v150 = vcvt.s32.f32 %v86
  %v151 = vcvt.s32.f32 %v87
  %v152 = vcvt.s32.f32 %v88
  %v153 = vcvt.s32.f32 %v89
  %v154 = vcvt.s32.f32 %v90
  %v155 = vcvt.s32.f32 %v91
  %v156 = vcvt.s32.f32 %v92
  %v157 = vcvt.s32.f32 %v93
  %v158 = vcvt.s32.f32 %v94
  %v159 = vcvt.s32.f32 %v95
  %v160 = vcvt.s32.f32 %v96
  %v161 = vcvt.s32.f32 %v97
  %v162 = vcvt.s32.f32 %v98
  %v163 = vcvt.s32.f32 %v99
  %v164 = vcvt.s32.f32 %v100
  %v165 = vcvt.s32.f32 %v101
  %v166 = vcvt.s32.f32 %v102
  %v167 = vcvt.s32.f32 %v103
  %v168 = vcvt.s32.f32 %v104
  %v169 = vcvt.s32.f32 %v105
  %v170 = vld [vmem:[%s1] sm:$0xff]
  %v171 = vld [vmem:[%s1 + $0x8] sm:$0xff]
  %v172 = vld [vmem:[%s1 + $0x10] sm:$0xff]
  %v173 = vld [vmem:[%s1 + $0x18] sm:$0xff]
  %v174 = vld [vmem:[%s1 + $0x20] sm:$0xff]
  %v175 = vld [vmem:[%s1 + $0x28] sm:$0xff]
  %v176 = vld [vmem:[%s1 + $0x30] sm:$0xff]
  %v177 = vld [vmem:[%s1 + $0x38] sm:$0xff]
  %v178 = vld [vmem:[%s1 + $0x40] sm:$0xff]
  %v179 = vld [vmem:[%s1 + $0x48] sm:$0xff]
  %v180 = vld [vmem:[%s1 + $0x50] sm:$0xff]
  %v181 = vld [vmem:[%s1 + $0x58] sm:$0xff]
  %v182 = vld [vmem:[%s1 + $0x60] sm:$0xff]
  %v183 = vld [vmem:[%s1 + $0x68] sm:$0xff]
  %v184 = vld [vmem:[%s1 + $0x70] sm:$0xff]
  %v185 = vld [vmem:[%s1 + $0x78] sm:$0xff]
  %v186 = vld [vmem:[%s1 + $0x80] sm:$0xff]
  %v187 = vld [vmem:[%s1 + $0x88] sm:$0xff]
  %v188 = vld [vmem:[%s1 + $0x90] sm:$0xff]
  %v189 = vld [vmem:[%s1 + $0x98] sm:$0xff]
  %v190 = vld [vmem:[%s1 + $0xa0] sm:$0xff]
  %v191 = vld [vmem:[%s1 + $0xa8] sm:$0xff]
  %v192 = vld [vmem:[%s1 + $0xb0] sm:$0xff]
  %v193 = vld [vmem:[%s1 + $0xb8] sm:$0xff]
  %v194 = vld [vmem:[%s1 + $0xc0] sm:$0xff]
  %v195 = vld [vmem:[%s1 + $0xc8] sm:$0xff]
  %v196 = vld [vmem:[%s1 + $0xd0] sm:$0xff]
  %v197 = vld [vmem:[%s1 + $0xd8] sm:$0xff]
  %v198 = vld [vmem:[%s1 + $0xe0] sm:$0xff]
  %v199 = vld [vmem:[%s1 + $0xe8] sm:$0xff]
  %v200 = vld [vmem:[%s1 + $0xf0] sm:$0xff]
  %v201 = vld [vmem:[%s1 + $0xf8] sm:$0xff]
  %202 = vmatprep.subr.mxu0 0.0
  %203 = vmatpush1.msra.mxu0 %v185
  %204 = vmatprep.subr.mxu0 0.0
  %205 = vmatpush1.msra.mxu0 %v184
  %206 = vmatprep.subr.mxu0 0.0
  %207 = vmatpush1.msra.mxu0 %v183
  %208 = vmatprep.subr.mxu0 0.0
  %209 = vmatpush1.msra.mxu0 %v182
  %210 = vmatprep.subr.mxu0 0.0
  %211 = vmatpush1.msra.mxu0 %v181
  %212 = vmatprep.subr.mxu0 0.0
  %213 = vmatpush1.msra.mxu0 %v180
  %214 = vmatprep.subr.mxu0 0.0
  %215 = vmatpush1.msra.mxu0 %v179
  %216 = vmatprep.subr.mxu0 0.0
  %217 = vmatpush1.msra.mxu0 %v178
  %218 = vmatprep.subr.mxu0 0.0
  %219 = vmatpush1.msra.mxu0 %v177
  %220 = vmatprep.subr.mxu0 0.0
  %221 = vmatpush1.msra.mxu0 %v176
  %222 = vmatprep.subr.mxu0 0.0
  %223 = vmatpush1.msra.mxu0 %v175
  %224 = vmatprep.subr.mxu0 0.0
  %225 = vmatpush1.msra.mxu0 %v174
  %226 = vmatprep.subr.mxu0 0.0
  %227 = vmatpush1.msra.mxu0 %v173
  %228 = vmatprep.subr.mxu0 0.0
  %229 = vmatpush1.msra.mxu0 %v172
  %230 = vmatprep.subr.mxu0 0.0
  %231 = vmatpush1.msra.mxu0 %v171
  %232 = vmatprep.subr.mxu0 0.0
  %233 = vmatpush1.msra.mxu0 %v170
  %234 = vmatprep.subr.mxu0 0.0
  %235 = vmatpush2.msra.mxu0 %v201
  %236 = vmatprep.subr.mxu0 0.0
  %237 = vmatpush2.msra.mxu0 %v200
  %238 = vmatprep.subr.mxu0 0.0
  %239 = vmatpush2.msra.mxu0 %v199
  %240 = vmatprep.subr.mxu0 0.0
  %241 = vmatpush2.msra.mxu0 %v198
  %242 = vmatprep.subr.mxu0 0.0
  %243 = vmatpush2.msra.mxu0 %v197
  %244 = vmatprep.subr.mxu0 0.0
  %245 = vmatpush2.msra.mxu0 %v196
  %246 = vmatprep.subr.mxu0 0.0
  %247 = vmatpush2.msra.mxu0 %v195
  %248 = vmatprep.subr.mxu0 0.0
  %249 = vmatpush2.msra.mxu0 %v194
  %250 = vmatprep.subr.mxu0 0.0
  %251 = vmatpush2.msra.mxu0 %v193
  %252 = vmatprep.subr.mxu0 0.0
  %253 = vmatpush2.msra.mxu0 %v192
  %254 = vmatprep.subr.mxu0 0.0
  %255 = vmatpush2.msra.mxu0 %v191
  %256 = vmatprep.subr.mxu0 0.0
  %257 = vmatpush2.msra.mxu0 %v190
  %258 = vmatprep.subr.mxu0 0.0
  %259 = vmatpush2.msra.mxu0 %v189
  %260 = vmatprep.subr.mxu0 0.0
  %261 = vmatpush2.msra.mxu0 %v188
  %262 = vmatprep.subr.mxu0 0.0
  %263 = vmatpush2.msra.mxu0 %v187
  %264 = vmatprep.subr.mxu0 0.0
  %265 = vmatpush2.msra.mxu0 %v186
  %266 = vmatprep.mubr.f32.mxu0 %v107
  %267 = vmatmul.mubr.f32.gmra.mxu0 %v106
  %v268 = vpop.f32.mrf.mxu0
  %v269 = vadd.f32 0.0, %v268
  %v270 = vpop.f32.mrf.mxu0
  %271 = vmatprep.mubr.f32.mxu0 %v109
  %272 = vmatmul.mubr.f32.gmra.mxu0 %v108
  %v273 = vpop.f32.mrf.mxu0
  %v274 = vadd.f32 0.0, %v273
  %v275 = vpop.f32.mrf.mxu0
  %276 = vmatprep.mubr.f32.mxu0 %v111
  %277 = vmatmul.mubr.f32.gmra.mxu0 %v110
  %v278 = vpop.f32.mrf.mxu0
  %v279 = vadd.f32 0.0, %v278
  %v280 = vpop.f32.mrf.mxu0
  %281 = vmatprep.mubr.f32.mxu0 %v113
  %282 = vmatmul.mubr.f32.gmra.mxu0 %v112
  %v283 = vpop.f32.mrf.mxu0
  %v284 = vadd.f32 0.0, %v283
  %v285 = vpop.f32.mrf.mxu0
  %286 = vmatprep.mubr.f32.mxu0 %v115
  %287 = vmatmul.mubr.f32.gmra.mxu0 %v114
  %v288 = vpop.f32.mrf.mxu0
  %v289 = vadd.f32 0.0, %v288
  %v290 = vpop.f32.mrf.mxu0
  %291 = vmatprep.mubr.f32.mxu0 %v117
  %292 = vmatmul.mubr.f32.gmra.mxu0 %v116
  %v293 = vpop.f32.mrf.mxu0
  %v294 = vadd.f32 0.0, %v293
  %v295 = vpop.f32.mrf.mxu0
  %296 = vmatprep.mubr.f32.mxu0 %v119
  %297 = vmatmul.mubr.f32.gmra.mxu0 %v118
  %v298 = vpop.f32.mrf.mxu0
  %v299 = vadd.f32 0.0, %v298
  %v300 = vpop.f32.mrf.mxu0
  %301 = vmatprep.mubr.f32.mxu0 %v121
  %302 = vmatmul.mubr.f32.gmra.mxu0 %v120
  %v303 = vpop.f32.mrf.mxu0
  %v304 = vadd.f32 0.0, %v303
  %v305 = vpop.f32.mrf.mxu0
  %306 = vmatprep.mubr.f32.mxu0 %v123
  %307 = vmatmul.mubr.f32.gmra.mxu0 %v122
  %v308 = vpop.f32.mrf.mxu0
  %v309 = vadd.f32 0.0, %v308
  %v310 = vpop.f32.mrf.mxu0
  %311 = vmatprep.mubr.f32.mxu0 %v125
  %312 = vmatmul.mubr.f32.gmra.mxu0 %v124
  %v313 = vpop.f32.mrf.mxu0
  %v314 = vadd.f32 0.0, %v313
  %v315 = vpop.f32.mrf.mxu0
  %316 = vmatprep.mubr.f32.mxu0 %v127
  %317 = vmatmul.mubr.f32.gmra.mxu0 %v126
  %v318 = vpop.f32.mrf.mxu0
  %v319 = vadd.f32 0.0, %v318
  %v320 = vpop.f32.mrf.mxu0
  %321 = vmatprep.mubr.f32.mxu0 %v129
  %322 = vmatmul.mubr.f32.gmra.mxu0 %v128
  %v323 = vpop.f32.mrf.mxu0
  %v324 = vadd.f32 0.0, %v323
  %v325 = vpop.f32.mrf.mxu0
  %326 = vmatprep.mubr.f32.mxu0 %v131
  %327 = vmatmul.mubr.f32.gmra.mxu0 %v130
  %v328 = vpop.f32.mrf.mxu0
  %v329 = vadd.f32 0.0, %v328
  %v330 = vpop.f32.mrf.mxu0
  %331 = vmatprep.mubr.f32.mxu0 %v133
  %332 = vmatmul.mubr.f32.gmra.mxu0 %v132
  %v333 = vpop.f32.mrf.mxu0
  %v334 = vadd.f32 0.0, %v333
  %v335 = vpop.f32.mrf.mxu0
  %336 = vmatprep.mubr.f32.mxu0 %v135
  %337 = vmatmul.mubr.f32.gmra.mxu0 %v134
  %v338 = vpop.f32.mrf.mxu0
  %v339 = vadd.f32 0.0, %v338
  %v340 = vpop.f32.mrf.mxu0
  %341 = vmatprep.mubr.f32.mxu0 %v137
  %342 = vmatmul.mubr.f32.gmra.mxu0 %v136
  %v343 = vpop.f32.mrf.mxu0
  %v344 = vadd.f32 0.0, %v343
  %v345 = vpop.f32.mrf.mxu0
  %346 = vmatprep.mubr.f32.mxu0 %v139
  %347 = vmatmul.mubr.f32.gmra.mxu0 %v138
  %v348 = vpop.f32.mrf.mxu0
  %v349 = vadd.f32 0.0, %v348
  %v350 = vpop.f32.mrf.mxu0
  %351 = vmatprep.mubr.f32.mxu0 %v141
  %352 = vmatmul.mubr.f32.gmra.mxu0 %v140
  %v353 = vpop.f32.mrf.mxu0
  %v354 = vadd.f32 0.0, %v353
  %v355 = vpop.f32.mrf.mxu0
  %356 = vmatprep.mubr.f32.mxu0 %v143
  %357 = vmatmul.mubr.f32.gmra.mxu0 %v142
  %v358 = vpop.f32.mrf.mxu0
  %v359 = vadd.f32 0.0, %v358
  %v360 = vpop.f32.mrf.mxu0
  %361 = vmatprep.mubr.f32.mxu0 %v145
  %362 = vmatmul.mubr.f32.gmra.mxu0 %v144
  %v363 = vpop.f32.mrf.mxu0
  %v364 = vadd.f32 0.0, %v363
  %v365 = vpop.f32.mrf.mxu0
  %366 = vmatprep.mubr.f32.mxu0 %v147
  %367 = vmatmul.mubr.f32.gmra.mxu0 %v146
  %v368 = vpop.f32.mrf.mxu0
  %v369 = vadd.f32 0.0, %v368
  %v370 = vpop.f32.mrf.mxu0
  %371 = vmatprep.mubr.f32.mxu0 %v149
  %372 = vmatmul.mubr.f32.gmra.mxu0 %v148
  %v373 = vpop.f32.mrf.mxu0
  %v374 = vadd.f32 0.0, %v373
  %v375 = vpop.f32.mrf.mxu0
  %376 = vmatprep.mubr.f32.mxu0 %v151
  %377 = vmatmul.mubr.f32.gmra.mxu0 %v150
  %v378 = vpop.f32.mrf.mxu0
  %v379 = vadd.f32 0.0, %v378
  %v380 = vpop.f32.mrf.mxu0
  %381 = vmatprep.mubr.f32.mxu0 %v153
  %382 = vmatmul.mubr.f32.gmra.mxu0 %v152
  %v383 = vpop.f32.mrf.mxu0
  %v384 = vadd.f32 0.0, %v383
  %v385 = vpop.f32.mrf.mxu0
  %386 = vmatprep.mubr.f32.mxu0 %v155
  %387 = vmatmul.mubr.f32.gmra.mxu0 %v154
  %v388 = vpop.f32.mrf.mxu0
  %v389 = vadd.f32 0.0, %v388
  %v390 = vpop.f32.mrf.mxu0
  %391 = vmatprep.mubr.f32.mxu0 %v157
  %392 = vmatmul.mubr.f32.gmra.mxu0 %v156
  %v393 = vpop.f32.mrf.mxu0
  %v394 = vadd.f32 0.0, %v393
  %v395 = vpop.f32.mrf.mxu0
  %396 = vmatprep.mubr.f32.mxu0 %v159
  %397 = vmatmul.mubr.f32.gmra.mxu0 %v158
  %v398 = vpop.f32.mrf.mxu0
  %v399 = vadd.f32 0.0, %v398
  %v400 = vpop.f32.mrf.mxu0
  %401 = vmatprep.mubr.f32.mxu0 %v161
  %402 = vmatmul.mubr.f32.gmra.mxu0 %v160
  %v403 = vpop.f32.mrf.mxu0
  %v404 = vadd.f32 0.0, %v403
  %v405 = vpop.f32.mrf.mxu0
  %406 = vmatprep.mubr.f32.mxu0 %v163
  %407 = vmatmul.mubr.f32.gmra.mxu0 %v162
  %v408 = vpop.f32.mrf.mxu0
  %v409 = vadd.f32 0.0, %v408
  %v410 = vpop.f32.mrf.mxu0
  %411 = vmatprep.mubr.f32.mxu0 %v165
  %412 = vmatmul.mubr.f32.gmra.mxu0 %v164
  %v413 = vpop.f32.mrf.mxu0
  %v414 = vadd.f32 0.0, %v413
  %v415 = vpop.f32.mrf.mxu0
  %416 = vmatprep.mubr.f32.mxu0 %v167
  %417 = vmatmul.mubr.f32.gmra.mxu0 %v166
  %v418 = vpop.f32.mrf.mxu0
  %v419 = vadd.f32 0.0, %v418
  %v420 = vpop.f32.mrf.mxu0
  %421 = vmatprep.mubr.f32.mxu0 %v169
  %422 = vmatmul.mubr.f32.gmra.mxu0 %v168
  %v423 = vpop.f32.mrf.mxu0
  %v424 = vadd.f32 0.0, %v423
  %v425 = vpop.f32.mrf.mxu0
  %426 = vdwg.mxu0
  %v427 = vld [vmem:[%s3] sm:$0xff]
  %v428 = vld [vmem:[%s3 + $0x8] sm:$0xff]
  %v429 = vld [vmem:[%s3 + $0x10] sm:$0xff]
  %v430 = vld [vmem:[%s3 + $0x18] sm:$0xff]
  %v431 = vld [vmem:[%s3 + $0x20] sm:$0xff]
  %v432 = vld [vmem:[%s3 + $0x28] sm:$0xff]
  %v433 = vld [vmem:[%s3 + $0x30] sm:$0xff]
  %v434 = vld [vmem:[%s3 + $0x38] sm:$0xff]
  %v435 = vld [vmem:[%s3 + $0x40] sm:$0xff]
  %v436 = vld [vmem:[%s3 + $0x48] sm:$0xff]
  %v437 = vld [vmem:[%s3 + $0x50] sm:$0xff]
  %v438 = vld [vmem:[%s3 + $0x58] sm:$0xff]
  %v439 = vld [vmem:[%s3 + $0x60] sm:$0xff]
  %v440 = vld [vmem:[%s3 + $0x68] sm:$0xff]
  %v441 = vld [vmem:[%s3 + $0x70] sm:$0xff]
  %v442 = vld [vmem:[%s3 + $0x78] sm:$0xff]
  %v443 = vld [vmem:[%s3 + $0x80] sm:$0xff]
  %v444 = vld [vmem:[%s3 + $0x88] sm:$0xff]
  %v445 = vld [vmem:[%s3 + $0x90] sm:$0xff]
  %v446 = vld [vmem:[%s3 + $0x98] sm:$0xff]
  %v447 = vld [vmem:[%s3 + $0xa0] sm:$0xff]
  %v448 = vld [vmem:[%s3 + $0xa8] sm:$0xff]
  %v449 = vld [vmem:[%s3 + $0xb0] sm:$0xff]
  %v450 = vld [vmem:[%s3 + $0xb8] sm:$0xff]
  %v451 = vld [vmem:[%s3 + $0xc0] sm:$0xff]
  %v452 = vld [vmem:[%s3 + $0xc8] sm:$0xff]
  %v453 = vld [vmem:[%s3 + $0xd0] sm:$0xff]
  %v454 = vld [vmem:[%s3 + $0xd8] sm:$0xff]
  %v455 = vld [vmem:[%s3 + $0xe0] sm:$0xff]
  %v456 = vld [vmem:[%s3 + $0xe8] sm:$0xff]
  %v457 = vld [vmem:[%s3 + $0xf0] sm:$0xff]
  %v458 = vld [vmem:[%s3 + $0xf8] sm:$0xff]
  %460 = vset.pattern.permute.xlu0 0
  %461 = vperm.xlu0 %460, %v427
  %v462 = vpop.permute.xlu0 %461
  %465 = vset.pattern.permute.xlu0 0
  %466 = vperm.xlu0 %465, %v428
  %v467 = vpop.permute.xlu0 %466
  %470 = vset.pattern.permute.xlu0 0
  %471 = vperm.xlu0 %470, %v429
  %v472 = vpop.permute.xlu0 %471
  %475 = vset.pattern.permute.xlu0 0
  %476 = vperm.xlu0 %475, %v430
  %v477 = vpop.permute.xlu0 %476
  %480 = vset.pattern.permute.xlu0 0
  %481 = vperm.xlu0 %480, %v431
  %v482 = vpop.permute.xlu0 %481
  %485 = vset.pattern.permute.xlu0 0
  %486 = vperm.xlu0 %485, %v432
  %v487 = vpop.permute.xlu0 %486
  %490 = vset.pattern.permute.xlu0 0
  %491 = vperm.xlu0 %490, %v433
  %v492 = vpop.permute.xlu0 %491
  %495 = vset.pattern.permute.xlu0 0
  %496 = vperm.xlu0 %495, %v434
  %v497 = vpop.permute.xlu0 %496
  %500 = vset.pattern.permute.xlu0 0
  %501 = vperm.xlu0 %500, %v435
  %v502 = vpop.permute.xlu0 %501
  %505 = vset.pattern.permute.xlu0 0
  %506 = vperm.xlu0 %505, %v436
  %v507 = vpop.permute.xlu0 %506
  %510 = vset.pattern.permute.xlu0 0
  %511 = vperm.xlu0 %510, %v437
  %v512 = vpop.permute.xlu0 %511
  %515 = vset.pattern.permute.xlu0 0
  %516 = vperm.xlu0 %515, %v438
  %v517 = vpop.permute.xlu0 %516
  %520 = vset.pattern.permute.xlu0 0
  %521 = vperm.xlu0 %520, %v439
  %v522 = vpop.permute.xlu0 %521
  %525 = vset.pattern.permute.xlu0 0
  %526 = vperm.xlu0 %525, %v440
  %v527 = vpop.permute.xlu0 %526
  %530 = vset.pattern.permute.xlu0 0
  %531 = vperm.xlu0 %530, %v441
  %v532 = vpop.permute.xlu0 %531
  %535 = vset.pattern.permute.xlu0 0
  %536 = vperm.xlu0 %535, %v442
  %v537 = vpop.permute.xlu0 %536
  %540 = vset.pattern.permute.xlu0 0
  %541 = vperm.xlu0 %540, %v443
  %v542 = vpop.permute.xlu0 %541
  %545 = vset.pattern.permute.xlu0 0
  %546 = vperm.xlu0 %545, %v444
  %v547 = vpop.permute.xlu0 %546
  %550 = vset.pattern.permute.xlu0 0
  %551 = vperm.xlu0 %550, %v445
  %v552 = vpop.permute.xlu0 %551
  %555 = vset.pattern.permute.xlu0 0
  %556 = vperm.xlu0 %555, %v446
  %v557 = vpop.permute.xlu0 %556
  %560 = vset.pattern.permute.xlu0 0
  %561 = vperm.xlu0 %560, %v447
  %v562 = vpop.permute.xlu0 %561
  %565 = vset.pattern.permute.xlu0 0
  %566 = vperm.xlu0 %565, %v448
  %v567 = vpop.permute.xlu0 %566
  %570 = vset.pattern.permute.xlu0 0
  %571 = vperm.xlu0 %570, %v449
  %v572 = vpop.permute.xlu0 %571
  %575 = vset.pattern.permute.xlu0 0
  %576 = vperm.xlu0 %575, %v450
  %v577 = vpop.permute.xlu0 %576
  %580 = vset.pattern.permute.xlu0 0
  %581 = vperm.xlu0 %580, %v451
  %v582 = vpop.permute.xlu0 %581
  %585 = vset.pattern.permute.xlu0 0
  %586 = vperm.xlu0 %585, %v452
  %v587 = vpop.permute.xlu0 %586
  %590 = vset.pattern.permute.xlu0 0
  %591 = vperm.xlu0 %590, %v453
  %v592 = vpop.permute.xlu0 %591
  %595 = vset.pattern.permute.xlu0 0
  %596 = vperm.xlu0 %595, %v454
  %v597 = vpop.permute.xlu0 %596
  %600 = vset.pattern.permute.xlu0 0
  %601 = vperm.xlu0 %600, %v455
  %v602 = vpop.permute.xlu0 %601
  %605 = vset.pattern.permute.xlu0 0
  %606 = vperm.xlu0 %605, %v456
  %v607 = vpop.permute.xlu0 %606
  %610 = vset.pattern.permute.xlu0 0
  %611 = vperm.xlu0 %610, %v457
  %v612 = vpop.permute.xlu0 %611
  %615 = vset.pattern.permute.xlu0 0
  %616 = vperm.xlu0 %615, %v458
  %v617 = vpop.permute.xlu0 %616
  %v619 = vmul.f32 %v269, %v462
  %v620 = vmul.f32 %v274, %v467
  %v621 = vmul.f32 %v279, %v472
  %v622 = vmul.f32 %v284, %v477
  %v623 = vmul.f32 %v289, %v482
  %v624 = vmul.f32 %v294, %v487
  %v625 = vmul.f32 %v299, %v492
  %v626 = vmul.f32 %v304, %v497
  %v627 = vmul.f32 %v309, %v502
  %v628 = vmul.f32 %v314, %v507
  %v629 = vmul.f32 %v319, %v512
  %v630 = vmul.f32 %v324, %v517
  %v631 = vmul.f32 %v329, %v522
  %v632 = vmul.f32 %v334, %v527
  %v633 = vmul.f32 %v339, %v532
  %v634 = vmul.f32 %v344, %v537
  %v635 = vmul.f32 %v349, %v542
  %v636 = vmul.f32 %v354, %v547
  %v637 = vmul.f32 %v359, %v552
  %v638 = vmul.f32 %v364, %v557
  %v639 = vmul.f32 %v369, %v562
  %v640 = vmul.f32 %v374, %v567
  %v641 = vmul.f32 %v379, %v572
  %v642 = vmul.f32 %v384, %v577
  %v643 = vmul.f32 %v389, %v582
  %v644 = vmul.f32 %v394, %v587
  %v645 = vmul.f32 %v399, %v592
  %v646 = vmul.f32 %v404, %v597
  %v647 = vmul.f32 %v409, %v602
  %v648 = vmul.f32 %v414, %v607
  %v649 = vmul.f32 %v419, %v612
  %v650 = vmul.f32 %v424, %v617
  %v651 = vld [vmem:[%s2] sm:$0xff]
  %v652 = vld [vmem:[%s2 + $0x8] sm:$0xff]
  %v653 = vld [vmem:[%s2 + $0x10] sm:$0xff]
  %v654 = vld [vmem:[%s2 + $0x18] sm:$0xff]
  %v655 = vld [vmem:[%s2 + $0x20] sm:$0xff]
  %v656 = vld [vmem:[%s2 + $0x28] sm:$0xff]
  %v657 = vld [vmem:[%s2 + $0x30] sm:$0xff]
  %v658 = vld [vmem:[%s2 + $0x38] sm:$0xff]
  %v659 = vld [vmem:[%s2 + $0x40] sm:$0xff]
  %v660 = vld [vmem:[%s2 + $0x48] sm:$0xff]
  %v661 = vld [vmem:[%s2 + $0x50] sm:$0xff]
  %v662 = vld [vmem:[%s2 + $0x58] sm:$0xff]
  %v663 = vld [vmem:[%s2 + $0x60] sm:$0xff]
  %v664 = vld [vmem:[%s2 + $0x68] sm:$0xff]
  %v665 = vld [vmem:[%s2 + $0x70] sm:$0xff]
  %v666 = vld [vmem:[%s2 + $0x78] sm:$0xff]
  %v667 = vld [vmem:[%s2 + $0x80] sm:$0xff]
  %v668 = vld [vmem:[%s2 + $0x88] sm:$0xff]
  %v669 = vld [vmem:[%s2 + $0x90] sm:$0xff]
  %v670 = vld [vmem:[%s2 + $0x98] sm:$0xff]
  %v671 = vld [vmem:[%s2 + $0xa0] sm:$0xff]
  %v672 = vld [vmem:[%s2 + $0xa8] sm:$0xff]
  %v673 = vld [vmem:[%s2 + $0xb0] sm:$0xff]
  %v674 = vld [vmem:[%s2 + $0xb8] sm:$0xff]
  %v675 = vld [vmem:[%s2 + $0xc0] sm:$0xff]
  %v676 = vld [vmem:[%s2 + $0xc8] sm:$0xff]
  %v677 = vld [vmem:[%s2 + $0xd0] sm:$0xff]
  %v678 = vld [vmem:[%s2 + $0xd8] sm:$0xff]
  %v679 = vld [vmem:[%s2 + $0xe0] sm:$0xff]
  %v680 = vld [vmem:[%s2 + $0xe8] sm:$0xff]
  %v681 = vld [vmem:[%s2 + $0xf0] sm:$0xff]
  %v682 = vld [vmem:[%s2 + $0xf8] sm:$0xff]
  %v683 = vld [vmem:[%s5] sm:$0xff]
  %v684 = vld [vmem:[%s4] sm:$0xff]
  %vm685 = vcmask 64512
  %v687 = vsel %vm685, %v619, 0
  %v690 = vsel %vm685, %v620, 0
  %v693 = vsel %vm685, %v621, 0
  %v696 = vsel %vm685, %v622, 0
  %v699 = vsel %vm685, %v623, 0
  %v702 = vsel %vm685, %v624, 0
  %v705 = vsel %vm685, %v625, 0
  %v708 = vsel %vm685, %v626, 0
  %v711 = vsel %vm685, %v627, 0
  %v714 = vsel %vm685, %v628, 0
  %v717 = vsel %vm685, %v629, 0
  %v720 = vsel %vm685, %v630, 0
  %v723 = vsel %vm685, %v631, 0
  %v726 = vsel %vm685, %v632, 0
  %v729 = vsel %vm685, %v633, 0
  %v732 = vsel %vm685, %v634, 0
  %v735 = vsel %vm685, %v635, 0
  %v738 = vsel %vm685, %v636, 0
  %v741 = vsel %vm685, %v637, 0
  %v744 = vsel %vm685, %v638, 0
  %v747 = vsel %vm685, %v639, 0
  %v750 = vsel %vm685, %v640, 0
  %v753 = vsel %vm685, %v641, 0
  %v756 = vsel %vm685, %v642, 0
  %v759 = vsel %vm685, %v643, 0
  %v762 = vsel %vm685, %v644, 0
  %v765 = vsel %vm685, %v645, 0
  %v768 = vsel %vm685, %v646, 0
  %v771 = vsel %vm685, %v647, 0
  %v774 = vsel %vm685, %v648, 0
  %v777 = vsel %vm685, %v649, 0
  %v780 = vsel %vm685, %v650, 0
  %782 = vmatprep.subr.mxu0 0.0
  %783 = vmatpush1.msra.mxu0 0.0
  %784 = vmatprep.subr.mxu0 0.0
  %785 = vmatpush1.msra.mxu0 0.0
  %786 = vmatprep.subr.mxu0 0.0
  %787 = vmatpush1.msra.mxu0 0.0
  %788 = vmatprep.subr.mxu0 0.0
  %789 = vmatpush1.msra.mxu0 0.0
  %790 = vmatprep.subr.mxu0 0.0
  %791 = vmatpush1.msra.mxu0 0.0
  %792 = vmatprep.subr.mxu0 0.0
  %793 = vmatpush1.msra.mxu0 0.0
  %794 = vmatprep.subr.mxu0 0.0
  %795 = vmatpush1.msra.mxu0 0.0
  %796 = vmatprep.subr.mxu0 0.0
  %797 = vmatpush1.msra.mxu0 0.0
  %798 = vmatprep.subr.mxu0 0.0
  %799 = vmatpush1.msra.mxu0 0.0
  %800 = vmatprep.subr.mxu0 0.0
  %801 = vmatpush1.msra.mxu0 0.0
  %802 = vmatprep.subr.mxu0 0.0
  %803 = vmatpush1.msra.mxu0 0.0
  %804 = vmatprep.subr.mxu0 0.0
  %805 = vmatpush1.msra.mxu0 0.0
  %806 = vmatprep.subr.mxu0 0.0
  %807 = vmatpush1.msra.mxu0 0.0
  %808 = vmatprep.subr.mxu0 0.0
  %809 = vmatpush1.msra.mxu0 0.0
  %810 = vmatprep.subr.mxu0 0.0
  %811 = vmatpush1.msra.mxu0 0.0
  %812 = vmatprep.subr.mxu0 0.0
  %813 = vmatpush1.msra.mxu0 %v684
  %814 = vmatprep.subr.mxu0 0.0
  %815 = vmatpush2.msra.mxu0 0.0
  %816 = vmatprep.subr.mxu0 0.0
  %817 = vmatpush2.msra.mxu0 0.0
  %818 = vmatprep.subr.mxu0 0.0
  %819 = vmatpush2.msra.mxu0 0.0
  %820 = vmatprep.subr.mxu0 0.0
  %821 = vmatpush2.msra.mxu0 0.0
  %822 = vmatprep.subr.mxu0 0.0
  %823 = vmatpush2.msra.mxu0 0.0
  %824 = vmatprep.subr.mxu0 0.0
  %825 = vmatpush2.msra.mxu0 0.0
  %826 = vmatprep.subr.mxu0 0.0
  %827 = vmatpush2.msra.mxu0 0.0
  %828 = vmatprep.subr.mxu0 0.0
  %829 = vmatpush2.msra.mxu0 0.0
  %830 = vmatprep.subr.mxu0 0.0
  %831 = vmatpush2.msra.mxu0 0.0
  %832 = vmatprep.subr.mxu0 0.0
  %833 = vmatpush2.msra.mxu0 0.0
  %834 = vmatprep.subr.mxu0 0.0
  %835 = vmatpush2.msra.mxu0 0.0
  %836 = vmatprep.subr.mxu0 0.0
  %837 = vmatpush2.msra.mxu0 0.0
  %838 = vmatprep.subr.mxu0 0.0
  %839 = vmatpush2.msra.mxu0 0.0
  %840 = vmatprep.subr.mxu0 0.0
  %841 = vmatpush2.msra.mxu0 0.0
  %842 = vmatprep.subr.mxu0 0.0
  %843 = vmatpush2.msra.mxu0 0.0
  %844 = vmatprep.subr.mxu0 0.0
  %845 = vmatpush2.msra.mxu0 0.0
  %846 = vmatprep.mubr.f32.mxu0 0.0
  %847 = vmatmul.mubr.f32.gmra.mxu0 %v687
  %v848 = vpop.f32.mrf.mxu0
  %v849 = vadd.f32 0.0, %v848
  %v850 = vpop.f32.mrf.mxu0
  %851 = vmatprep.mubr.f32.mxu0 0.0
  %852 = vmatmul.mubr.f32.gmra.mxu0 %v690
  %v853 = vpop.f32.mrf.mxu0
  %v854 = vadd.f32 0.0, %v853
  %v855 = vpop.f32.mrf.mxu0
  %856 = vmatprep.mubr.f32.mxu0 0.0
  %857 = vmatmul.mubr.f32.gmra.mxu0 %v693
  %v858 = vpop.f32.mrf.mxu0
  %v859 = vadd.f32 0.0, %v858
  %v860 = vpop.f32.mrf.mxu0
  %861 = vmatprep.mubr.f32.mxu0 0.0
  %862 = vmatmul.mubr.f32.gmra.mxu0 %v696
  %v863 = vpop.f32.mrf.mxu0
  %v864 = vadd.f32 0.0, %v863
  %v865 = vpop.f32.mrf.mxu0
  %866 = vmatprep.mubr.f32.mxu0 0.0
  %867 = vmatmul.mubr.f32.gmra.mxu0 %v699
  %v868 = vpop.f32.mrf.mxu0
  %v869 = vadd.f32 0.0, %v868
  %v870 = vpop.f32.mrf.mxu0
  %871 = vmatprep.mubr.f32.mxu0 0.0
  %872 = vmatmul.mubr.f32.gmra.mxu0 %v702
  %v873 = vpop.f32.mrf.mxu0
  %v874 = vadd.f32 0.0, %v873
  %v875 = vpop.f32.mrf.mxu0
  %876 = vmatprep.mubr.f32.mxu0 0.0
  %877 = vmatmul.mubr.f32.gmra.mxu0 %v705
  %v878 = vpop.f32.mrf.mxu0
  %v879 = vadd.f32 0.0, %v878
  %v880 = vpop.f32.mrf.mxu0
  %881 = vmatprep.mubr.f32.mxu0 0.0
  %882 = vmatmul.mubr.f32.gmra.mxu0 %v708
  %v883 = vpop.f32.mrf.mxu0
  %v884 = vadd.f32 0.0, %v883
  %v885 = vpop.f32.mrf.mxu0
  %886 = vmatprep.mubr.f32.mxu0 0.0
  %887 = vmatmul.mubr.f32.gmra.mxu0 %v711
  %v888 = vpop.f32.mrf.mxu0
  %v889 = vadd.f32 0.0, %v888
  %v890 = vpop.f32.mrf.mxu0
  %891 = vmatprep.mubr.f32.mxu0 0.0
  %892 = vmatmul.mubr.f32.gmra.mxu0 %v714
  %v893 = vpop.f32.mrf.mxu0
  %v894 = vadd.f32 0.0, %v893
  %v895 = vpop.f32.mrf.mxu0
  %896 = vmatprep.mubr.f32.mxu0 0.0
  %897 = vmatmul.mubr.f32.gmra.mxu0 %v717
  %v898 = vpop.f32.mrf.mxu0
  %v899 = vadd.f32 0.0, %v898
  %v900 = vpop.f32.mrf.mxu0
  %901 = vmatprep.mubr.f32.mxu0 0.0
  %902 = vmatmul.mubr.f32.gmra.mxu0 %v720
  %v903 = vpop.f32.mrf.mxu0
  %v904 = vadd.f32 0.0, %v903
  %v905 = vpop.f32.mrf.mxu0
  %906 = vmatprep.mubr.f32.mxu0 0.0
  %907 = vmatmul.mubr.f32.gmra.mxu0 %v723
  %v908 = vpop.f32.mrf.mxu0
  %v909 = vadd.f32 0.0, %v908
  %v910 = vpop.f32.mrf.mxu0
  %911 = vmatprep.mubr.f32.mxu0 0.0
  %912 = vmatmul.mubr.f32.gmra.mxu0 %v726
  %v913 = vpop.f32.mrf.mxu0
  %v914 = vadd.f32 0.0, %v913
  %v915 = vpop.f32.mrf.mxu0
  %916 = vmatprep.mubr.f32.mxu0 0.0
  %917 = vmatmul.mubr.f32.gmra.mxu0 %v729
  %v918 = vpop.f32.mrf.mxu0
  %v919 = vadd.f32 0.0, %v918
  %v920 = vpop.f32.mrf.mxu0
  %921 = vmatprep.mubr.f32.mxu0 0.0
  %922 = vmatmul.mubr.f32.gmra.mxu0 %v732
  %v923 = vpop.f32.mrf.mxu0
  %v924 = vadd.f32 0.0, %v923
  %v925 = vpop.f32.mrf.mxu0
  %926 = vmatprep.mubr.f32.mxu0 0.0
  %927 = vmatmul.mubr.f32.gmra.mxu0 %v735
  %v928 = vpop.f32.mrf.mxu0
  %v929 = vadd.f32 0.0, %v928
  %v930 = vpop.f32.mrf.mxu0
  %931 = vmatprep.mubr.f32.mxu0 0.0
  %932 = vmatmul.mubr.f32.gmra.mxu0 %v738
  %v933 = vpop.f32.mrf.mxu0
  %v934 = vadd.f32 0.0, %v933
  %v935 = vpop.f32.mrf.mxu0
  %936 = vmatprep.mubr.f32.mxu0 0.0
  %937 = vmatmul.mubr.f32.gmra.mxu0 %v741
  %v938 = vpop.f32.mrf.mxu0
  %v939 = vadd.f32 0.0, %v938
  %v940 = vpop.f32.mrf.mxu0
  %941 = vmatprep.mubr.f32.mxu0 0.0
  %942 = vmatmul.mubr.f32.gmra.mxu0 %v744
  %v943 = vpop.f32.mrf.mxu0
  %v944 = vadd.f32 0.0, %v943
  %v945 = vpop.f32.mrf.mxu0
  %946 = vmatprep.mubr.f32.mxu0 0.0
  %947 = vmatmul.mubr.f32.gmra.mxu0 %v747
  %v948 = vpop.f32.mrf.mxu0
  %v949 = vadd.f32 0.0, %v948
  %v950 = vpop.f32.mrf.mxu0
  %951 = vmatprep.mubr.f32.mxu0 0.0
  %952 = vmatmul.mubr.f32.gmra.mxu0 %v750
  %v953 = vpop.f32.mrf.mxu0
  %v954 = vadd.f32 0.0, %v953
  %v955 = vpop.f32.mrf.mxu0
  %956 = vmatprep.mubr.f32.mxu0 0.0
  %957 = vmatmul.mubr.f32.gmra.mxu0 %v753
  %v958 = vpop.f32.mrf.mxu0
  %v959 = vadd.f32 0.0, %v958
  %v960 = vpop.f32.mrf.mxu0
  %961 = vmatprep.mubr.f32.mxu0 0.0
  %962 = vmatmul.mubr.f32.gmra.mxu0 %v756
  %v963 = vpop.f32.mrf.mxu0
  %v964 = vadd.f32 0.0, %v963
  %v965 = vpop.f32.mrf.mxu0
  %966 = vmatprep.mubr.f32.mxu0 0.0
  %967 = vmatmul.mubr.f32.gmra.mxu0 %v759
  %v968 = vpop.f32.mrf.mxu0
  %v969 = vadd.f32 0.0, %v968
  %v970 = vpop.f32.mrf.mxu0
  %971 = vmatprep.mubr.f32.mxu0 0.0
  %972 = vmatmul.mubr.f32.gmra.mxu0 %v762
  %v973 = vpop.f32.mrf.mxu0
  %v974 = vadd.f32 0.0, %v973
  %v975 = vpop.f32.mrf.mxu0
  %976 = vmatprep.mubr.f32.mxu0 0.0
  %977 = vmatmul.mubr.f32.gmra.mxu0 %v765
  %v978 = vpop.f32.mrf.mxu0
  %v979 = vadd.f32 0.0, %v978
  %v980 = vpop.f32.mrf.mxu0
  %981 = vmatprep.mubr.f32.mxu0 0.0
  %982 = vmatmul.mubr.f32.gmra.mxu0 %v768
  %v983 = vpop.f32.mrf.mxu0
  %v984 = vadd.f32 0.0, %v983
  %v985 = vpop.f32.mrf.mxu0
  %986 = vmatprep.mubr.f32.mxu0 0.0
  %987 = vmatmul.mubr.f32.gmra.mxu0 %v771
  %v988 = vpop.f32.mrf.mxu0
  %v989 = vadd.f32 0.0, %v988
  %v990 = vpop.f32.mrf.mxu0
  %991 = vmatprep.mubr.f32.mxu0 0.0
  %992 = vmatmul.mubr.f32.gmra.mxu0 %v774
  %v993 = vpop.f32.mrf.mxu0
  %v994 = vadd.f32 0.0, %v993
  %v995 = vpop.f32.mrf.mxu0
  %996 = vmatprep.mubr.f32.mxu0 0.0
  %997 = vmatmul.mubr.f32.gmra.mxu0 %v777
  %v998 = vpop.f32.mrf.mxu0
  %v999 = vadd.f32 0.0, %v998
  %v1000 = vpop.f32.mrf.mxu0
  %1001 = vmatprep.mubr.f32.mxu0 0.0
  %1002 = vmatmul.mubr.f32.gmra.mxu0 %v780
  %v1003 = vpop.f32.mrf.mxu0
  %v1004 = vadd.f32 0.0, %v1003
  %v1005 = vpop.f32.mrf.mxu0
  %1006 = vdwg.mxu0
  %v1008 = vsel %vm685, %v651, 0
  %v1011 = vsel %vm685, %v652, 0
  %v1014 = vsel %vm685, %v653, 0
  %v1017 = vsel %vm685, %v654, 0
  %v1020 = vsel %vm685, %v655, 0
  %v1023 = vsel %vm685, %v656, 0
  %v1026 = vsel %vm685, %v657, 0
  %v1029 = vsel %vm685, %v658, 0
  %v1032 = vsel %vm685, %v659, 0
  %v1035 = vsel %vm685, %v660, 0
  %v1038 = vsel %vm685, %v661, 0
  %v1041 = vsel %vm685, %v662, 0
  %v1044 = vsel %vm685, %v663, 0
  %v1047 = vsel %vm685, %v664, 0
  %v1050 = vsel %vm685, %v665, 0
  %v1053 = vsel %vm685, %v666, 0
  %v1056 = vsel %vm685, %v667, 0
  %v1059 = vsel %vm685, %v668, 0
  %v1062 = vsel %vm685, %v669, 0
  %v1065 = vsel %vm685, %v670, 0
  %v1068 = vsel %vm685, %v671, 0
  %v1071 = vsel %vm685, %v672, 0
  %v1074 = vsel %vm685, %v673, 0
  %v1077 = vsel %vm685, %v674, 0
  %v1080 = vsel %vm685, %v675, 0
  %v1083 = vsel %vm685, %v676, 0
  %v1086 = vsel %vm685, %v677, 0
  %v1089 = vsel %vm685, %v678, 0
  %v1092 = vsel %vm685, %v679, 0
  %v1095 = vsel %vm685, %v680, 0
  %v1098 = vsel %vm685, %v681, 0
  %v1101 = vsel %vm685, %v682, 0
  %1103 = vmatprep.subr.mxu0 0.0
  %1104 = vmatpush1.msra.mxu0 0.0
  %1105 = vmatprep.subr.mxu0 0.0
  %1106 = vmatpush1.msra.mxu0 0.0
  %1107 = vmatprep.subr.mxu0 0.0
  %1108 = vmatpush1.msra.mxu0 0.0
  %1109 = vmatprep.subr.mxu0 0.0
  %1110 = vmatpush1.msra.mxu0 0.0
  %1111 = vmatprep.subr.mxu0 0.0
  %1112 = vmatpush1.msra.mxu0 0.0
  %1113 = vmatprep.subr.mxu0 0.0
  %1114 = vmatpush1.msra.mxu0 0.0
  %1115 = vmatprep.subr.mxu0 0.0
  %1116 = vmatpush1.msra.mxu0 0.0
  %1117 = vmatprep.subr.mxu0 0.0
  %1118 = vmatpush1.msra.mxu0 0.0
  %1119 = vmatprep.subr.mxu0 0.0
  %1120 = vmatpush1.msra.mxu0 0.0
  %1121 = vmatprep.subr.mxu0 0.0
  %1122 = vmatpush1.msra.mxu0 0.0
  %1123 = vmatprep.subr.mxu0 0.0
  %1124 = vmatpush1.msra.mxu0 0.0
  %1125 = vmatprep.subr.mxu0 0.0
  %1126 = vmatpush1.msra.mxu0 0.0
  %1127 = vmatprep.subr.mxu0 0.0
  %1128 = vmatpush1.msra.mxu0 0.0
  %1129 = vmatprep.subr.mxu0 0.0
  %1130 = vmatpush1.msra.mxu0 0.0
  %1131 = vmatprep.subr.mxu0 0.0
  %1132 = vmatpush1.msra.mxu0 0.0
  %1133 = vmatprep.subr.mxu0 0.0
  %1134 = vmatpush1.msra.mxu0 %v683
  %1135 = vmatprep.subr.mxu0 0.0
  %1136 = vmatpush2.msra.mxu0 0.0
  %1137 = vmatprep.subr.mxu0 0.0
  %1138 = vmatpush2.msra.mxu0 0.0
  %1139 = vmatprep.subr.mxu0 0.0
  %1140 = vmatpush2.msra.mxu0 0.0
  %1141 = vmatprep.subr.mxu0 0.0
  %1142 = vmatpush2.msra.mxu0 0.0
  %1143 = vmatprep.subr.mxu0 0.0
  %1144 = vmatpush2.msra.mxu0 0.0
  %1145 = vmatprep.subr.mxu0 0.0
  %1146 = vmatpush2.msra.mxu0 0.0
  %1147 = vmatprep.subr.mxu0 0.0
  %1148 = vmatpush2.msra.mxu0 0.0
  %1149 = vmatprep.subr.mxu0 0.0
  %1150 = vmatpush2.msra.mxu0 0.0
  %1151 = vmatprep.subr.mxu0 0.0
  %1152 = vmatpush2.msra.mxu0 0.0
  %1153 = vmatprep.subr.mxu0 0.0
  %1154 = vmatpush2.msra.mxu0 0.0
  %1155 = vmatprep.subr.mxu0 0.0
  %1156 = vmatpush2.msra.mxu0 0.0
  %1157 = vmatprep.subr.mxu0 0.0
  %1158 = vmatpush2.msra.mxu0 0.0
  %1159 = vmatprep.subr.mxu0 0.0
  %1160 = vmatpush2.msra.mxu0 0.0
  %1161 = vmatprep.subr.mxu0 0.0
  %1162 = vmatpush2.msra.mxu0 0.0
  %1163 = vmatprep.subr.mxu0 0.0
  %1164 = vmatpush2.msra.mxu0 0.0
  %1165 = vmatprep.subr.mxu0 0.0
  %1166 = vmatpush2.msra.mxu0 0.0
  %1167 = vmatprep.mubr.f32.mxu0 0.0
  %1168 = vmatmul.mubr.f32.gmra.mxu0 %v1008
  %v1169 = vpop.f32.mrf.mxu0
  %v1170 = vadd.f32 %v849, %v1169
  %v1171 = vpop.f32.mrf.mxu0
  %1172 = vmatprep.mubr.f32.mxu0 0.0
  %1173 = vmatmul.mubr.f32.gmra.mxu0 %v1011
  %v1174 = vpop.f32.mrf.mxu0
  %v1175 = vadd.f32 %v854, %v1174
  %v1176 = vpop.f32.mrf.mxu0
  %1177 = vmatprep.mubr.f32.mxu0 0.0
  %1178 = vmatmul.mubr.f32.gmra.mxu0 %v1014
  %v1179 = vpop.f32.mrf.mxu0
  %v1180 = vadd.f32 %v859, %v1179
  %v1181 = vpop.f32.mrf.mxu0
  %1182 = vmatprep.mubr.f32.mxu0 0.0
  %1183 = vmatmul.mubr.f32.gmra.mxu0 %v1017
  %v1184 = vpop.f32.mrf.mxu0
  %v1185 = vadd.f32 %v864, %v1184
  %v1186 = vpop.f32.mrf.mxu0
  %1187 = vmatprep.mubr.f32.mxu0 0.0
  %1188 = vmatmul.mubr.f32.gmra.mxu0 %v1020
  %v1189 = vpop.f32.mrf.mxu0
  %v1190 = vadd.f32 %v869, %v1189
  %v1191 = vpop.f32.mrf.mxu0
  %1192 = vmatprep.mubr.f32.mxu0 0.0
  %1193 = vmatmul.mubr.f32.gmra.mxu0 %v1023
  %v1194 = vpop.f32.mrf.mxu0
  %v1195 = vadd.f32 %v874, %v1194
  %v1196 = vpop.f32.mrf.mxu0
  %1197 = vmatprep.mubr.f32.mxu0 0.0
  %1198 = vmatmul.mubr.f32.gmra.mxu0 %v1026
  %v1199 = vpop.f32.mrf.mxu0
  %v1200 = vadd.f32 %v879, %v1199
  %v1201 = vpop.f32.mrf.mxu0
  %1202 = vmatprep.mubr.f32.mxu0 0.0
  %1203 = vmatmul.mubr.f32.gmra.mxu0 %v1029
  %v1204 = vpop.f32.mrf.mxu0
  %v1205 = vadd.f32 %v884, %v1204
  %v1206 = vpop.f32.mrf.mxu0
  %1207 = vmatprep.mubr.f32.mxu0 0.0
  %1208 = vmatmul.mubr.f32.gmra.mxu0 %v1032
  %v1209 = vpop.f32.mrf.mxu0
  %v1210 = vadd.f32 %v889, %v1209
  %v1211 = vpop.f32.mrf.mxu0
  %1212 = vmatprep.mubr.f32.mxu0 0.0
  %1213 = vmatmul.mubr.f32.gmra.mxu0 %v1035
  %v1214 = vpop.f32.mrf.mxu0
  %v1215 = vadd.f32 %v894, %v1214
  %v1216 = vpop.f32.mrf.mxu0
  %1217 = vmatprep.mubr.f32.mxu0 0.0
  %1218 = vmatmul.mubr.f32.gmra.mxu0 %v1038
  %v1219 = vpop.f32.mrf.mxu0
  %v1220 = vadd.f32 %v899, %v1219
  %v1221 = vpop.f32.mrf.mxu0
  %1222 = vmatprep.mubr.f32.mxu0 0.0
  %1223 = vmatmul.mubr.f32.gmra.mxu0 %v1041
  %v1224 = vpop.f32.mrf.mxu0
  %v1225 = vadd.f32 %v904, %v1224
  %v1226 = vpop.f32.mrf.mxu0
  %1227 = vmatprep.mubr.f32.mxu0 0.0
  %1228 = vmatmul.mubr.f32.gmra.mxu0 %v1044
  %v1229 = vpop.f32.mrf.mxu0
  %v1230 = vadd.f32 %v909, %v1229
  %v1231 = vpop.f32.mrf.mxu0
  %1232 = vmatprep.mubr.f32.mxu0 0.0
  %1233 = vmatmul.mubr.f32.gmra.mxu0 %v1047
  %v1234 = vpop.f32.mrf.mxu0
  %v1235 = vadd.f32 %v914, %v1234
  %v1236 = vpop.f32.mrf.mxu0
  %1237 = vmatprep.mubr.f32.mxu0 0.0
  %1238 = vmatmul.mubr.f32.gmra.mxu0 %v1050
  %v1239 = vpop.f32.mrf.mxu0
  %v1240 = vadd.f32 %v919, %v1239
  %v1241 = vpop.f32.mrf.mxu0
  %1242 = vmatprep.mubr.f32.mxu0 0.0
  %1243 = vmatmul.mubr.f32.gmra.mxu0 %v1053
  %v1244 = vpop.f32.mrf.mxu0
  %v1245 = vadd.f32 %v924, %v1244
  %v1246 = vpop.f32.mrf.mxu0
  %1247 = vmatprep.mubr.f32.mxu0 0.0
  %1248 = vmatmul.mubr.f32.gmra.mxu0 %v1056
  %v1249 = vpop.f32.mrf.mxu0
  %v1250 = vadd.f32 %v929, %v1249
  %v1251 = vpop.f32.mrf.mxu0
  %1252 = vmatprep.mubr.f32.mxu0 0.0
  %1253 = vmatmul.mubr.f32.gmra.mxu0 %v1059
  %v1254 = vpop.f32.mrf.mxu0
  %v1255 = vadd.f32 %v934, %v1254
  %v1256 = vpop.f32.mrf.mxu0
  %1257 = vmatprep.mubr.f32.mxu0 0.0
  %1258 = vmatmul.mubr.f32.gmra.mxu0 %v1062
  %v1259 = vpop.f32.mrf.mxu0
  %v1260 = vadd.f32 %v939, %v1259
  %v1261 = vpop.f32.mrf.mxu0
  %1262 = vmatprep.mubr.f32.mxu0 0.0
  %1263 = vmatmul.mubr.f32.gmra.mxu0 %v1065
  %v1264 = vpop.f32.mrf.mxu0
  %v1265 = vadd.f32 %v944, %v1264
  %v1266 = vpop.f32.mrf.mxu0
  %1267 = vmatprep.mubr.f32.mxu0 0.0
  %1268 = vmatmul.mubr.f32.gmra.mxu0 %v1068
  %v1269 = vpop.f32.mrf.mxu0
  %v1270 = vadd.f32 %v949, %v1269
  %v1271 = vpop.f32.mrf.mxu0
  %1272 = vmatprep.mubr.f32.mxu0 0.0
  %1273 = vmatmul.mubr.f32.gmra.mxu0 %v1071
  %v1274 = vpop.f32.mrf.mxu0
  %v1275 = vadd.f32 %v954, %v1274
  %v1276 = vpop.f32.mrf.mxu0
  %1277 = vmatprep.mubr.f32.mxu0 0.0
  %1278 = vmatmul.mubr.f32.gmra.mxu0 %v1074
  %v1279 = vpop.f32.mrf.mxu0
  %v1280 = vadd.f32 %v959, %v1279
  %v1281 = vpop.f32.mrf.mxu0
  %1282 = vmatprep.mubr.f32.mxu0 0.0
  %1283 = vmatmul.mubr.f32.gmra.mxu0 %v1077
  %v1284 = vpop.f32.mrf.mxu0
  %v1285 = vadd.f32 %v964, %v1284
  %v1286 = vpop.f32.mrf.mxu0
  %1287 = vmatprep.mubr.f32.mxu0 0.0
  %1288 = vmatmul.mubr.f32.gmra.mxu0 %v1080
  %v1289 = vpop.f32.mrf.mxu0
  %v1290 = vadd.f32 %v969, %v1289
  %v1291 = vpop.f32.mrf.mxu0
  %1292 = vmatprep.mubr.f32.mxu0 0.0
  %1293 = vmatmul.mubr.f32.gmra.mxu0 %v1083
  %v1294 = vpop.f32.mrf.mxu0
  %v1295 = vadd.f32 %v974, %v1294
  %v1296 = vpop.f32.mrf.mxu0
  %1297 = vmatprep.mubr.f32.mxu0 0.0
  %1298 = vmatmul.mubr.f32.gmra.mxu0 %v1086
  %v1299 = vpop.f32.mrf.mxu0
  %v1300 = vadd.f32 %v979, %v1299
  %v1301 = vpop.f32.mrf.mxu0
  %1302 = vmatprep.mubr.f32.mxu0 0.0
  %1303 = vmatmul.mubr.f32.gmra.mxu0 %v1089
  %v1304 = vpop.f32.mrf.mxu0
  %v1305 = vadd.f32 %v984, %v1304
  %v1306 = vpop.f32.mrf.mxu0
  %1307 = vmatprep.mubr.f32.mxu0 0.0
  %1308 = vmatmul.mubr.f32.gmra.mxu0 %v1092
  %v1309 = vpop.f32.mrf.mxu0
  %v1310 = vadd.f32 %v989, %v1309
  %v1311 = vpop.f32.mrf.mxu0
  %1312 = vmatprep.mubr.f32.mxu0 0.0
  %1313 = vmatmul.mubr.f32.gmra.mxu0 %v1095
  %v1314 = vpop.f32.mrf.mxu0
  %v1315 = vadd.f32 %v994, %v1314
  %v1316 = vpop.f32.mrf.mxu0
  %1317 = vmatprep.mubr.f32.mxu0 0.0
  %1318 = vmatmul.mubr.f32.gmra.mxu0 %v1098
  %v1319 = vpop.f32.mrf.mxu0
  %v1320 = vadd.f32 %v999, %v1319
  %v1321 = vpop.f32.mrf.mxu0
  %1322 = vmatprep.mubr.f32.mxu0 0.0
  %1323 = vmatmul.mubr.f32.gmra.mxu0 %v1101
  %v1324 = vpop.f32.mrf.mxu0
  %v1325 = vadd.f32 %v1004, %v1324
  %v1326 = vpop.f32.mrf.mxu0
  %1327 = vdwg.mxu0
  %v1328 = vld [vmem:[%s6] sm:$0x1]
  %v1330 = vlaneseq
  %v1331 = vshrl.u32 %v1330, 7
  %v1332 = vsub.s32 0, %v1331
  %v1333 = vrot.slane %v1328, %v1332
  %v1335 = vadd.f32 %v1170, %v1333
  %v1336 = vadd.f32 %v1175, %v1333
  %v1337 = vadd.f32 %v1180, %v1333
  %v1338 = vadd.f32 %v1185, %v1333
  %v1339 = vadd.f32 %v1190, %v1333
  %v1340 = vadd.f32 %v1195, %v1333
  %v1341 = vadd.f32 %v1200, %v1333
  %v1342 = vadd.f32 %v1205, %v1333
  %v1343 = vadd.f32 %v1210, %v1333
  %v1344 = vadd.f32 %v1215, %v1333
  %v1345 = vadd.f32 %v1220, %v1333
  %v1346 = vadd.f32 %v1225, %v1333
  %v1347 = vadd.f32 %v1230, %v1333
  %v1348 = vadd.f32 %v1235, %v1333
  %v1349 = vadd.f32 %v1240, %v1333
  %v1350 = vadd.f32 %v1245, %v1333
  %v1351 = vadd.f32 %v1250, %v1333
  %v1352 = vadd.f32 %v1255, %v1333
  %v1353 = vadd.f32 %v1260, %v1333
  %v1354 = vadd.f32 %v1265, %v1333
  %v1355 = vadd.f32 %v1270, %v1333
  %v1356 = vadd.f32 %v1275, %v1333
  %v1357 = vadd.f32 %v1280, %v1333
  %v1358 = vadd.f32 %v1285, %v1333
  %v1359 = vadd.f32 %v1290, %v1333
  %v1360 = vadd.f32 %v1295, %v1333
  %v1361 = vadd.f32 %v1300, %v1333
  %v1362 = vadd.f32 %v1305, %v1333
  %v1363 = vadd.f32 %v1310, %v1333
  %v1364 = vadd.f32 %v1315, %v1333
  %v1365 = vadd.f32 %v1320, %v1333
  %v1366 = vadd.f32 %v1325, %v1333
  %vm1367 = vcmask 261120
  %1368 = vst.msk [vmem:[%s7] sm:$0xff] %vm1367, %v1335
  %1369 = vst.msk [vmem:[%s7 + $0x8] sm:$0xff] %vm1367, %v1336
  %1370 = vst.msk [vmem:[%s7 + $0x10] sm:$0xff] %vm1367, %v1337
  %1371 = vst.msk [vmem:[%s7 + $0x18] sm:$0xff] %vm1367, %v1338
  %1372 = vst.msk [vmem:[%s7 + $0x20] sm:$0xff] %vm1367, %v1339
  %1373 = vst.msk [vmem:[%s7 + $0x28] sm:$0xff] %vm1367, %v1340
  %1374 = vst.msk [vmem:[%s7 + $0x30] sm:$0xff] %vm1367, %v1341
  %1375 = vst.msk [vmem:[%s7 + $0x38] sm:$0xff] %vm1367, %v1342
  %1376 = vst.msk [vmem:[%s7 + $0x40] sm:$0xff] %vm1367, %v1343
  %1377 = vst.msk [vmem:[%s7 + $0x48] sm:$0xff] %vm1367, %v1344
  %1378 = vst.msk [vmem:[%s7 + $0x50] sm:$0xff] %vm1367, %v1345
  %1379 = vst.msk [vmem:[%s7 + $0x58] sm:$0xff] %vm1367, %v1346
  %1380 = vst.msk [vmem:[%s7 + $0x60] sm:$0xff] %vm1367, %v1347
  %1381 = vst.msk [vmem:[%s7 + $0x68] sm:$0xff] %vm1367, %v1348
  %1382 = vst.msk [vmem:[%s7 + $0x70] sm:$0xff] %vm1367, %v1349
  %1383 = vst.msk [vmem:[%s7 + $0x78] sm:$0xff] %vm1367, %v1350
  %1384 = vst.msk [vmem:[%s7 + $0x80] sm:$0xff] %vm1367, %v1351
  %1385 = vst.msk [vmem:[%s7 + $0x88] sm:$0xff] %vm1367, %v1352
  %1386 = vst.msk [vmem:[%s7 + $0x90] sm:$0xff] %vm1367, %v1353
  %1387 = vst.msk [vmem:[%s7 + $0x98] sm:$0xff] %vm1367, %v1354
  %1388 = vst.msk [vmem:[%s7 + $0xa0] sm:$0xff] %vm1367, %v1355
  %1389 = vst.msk [vmem:[%s7 + $0xa8] sm:$0xff] %vm1367, %v1356
  %1390 = vst.msk [vmem:[%s7 + $0xb0] sm:$0xff] %vm1367, %v1357
  %1391 = vst.msk [vmem:[%s7 + $0xb8] sm:$0xff] %vm1367, %v1358
  %1392 = vst.msk [vmem:[%s7 + $0xc0] sm:$0xff] %vm1367, %v1359
  %1393 = vst.msk [vmem:[%s7 + $0xc8] sm:$0xff] %vm1367, %v1360
  %1394 = vst.msk [vmem:[%s7 + $0xd0] sm:$0xff] %vm1367, %v1361
  %1395 = vst.msk [vmem:[%s7 + $0xd8] sm:$0xff] %vm1367, %v1362
  %1396 = vst.msk [vmem:[%s7 + $0xe0] sm:$0xff] %vm1367, %v1363
  %1397 = vst.msk [vmem:[%s7 + $0xe8] sm:$0xff] %vm1367, %v1364
  %1398 = vst.msk [vmem:[%s7 + $0xf0] sm:$0xff] %vm1367, %v1365
  %1399 = vst.msk [vmem:[%s7 + $0xf8] sm:$0xff] %vm1367, %v1366
  // Predicated region
  $region30: #{sage_conv_forward.1} parent=0 // pred_check
    _
  $region31: #{sage_conv_forward.1} parent=0 // pred_check_branch
    %1401 = sbr.rel (0) target = $region33
  $region32: #{sage_conv_forward.1} parent=0 // pred_region
    _
  $region33: #{sage_conv_forward.1} parent=0 // pred_fallthru
    _
  // Predicated region
  $region34: #{sage_conv_forward.1} parent=0 // pred_check
    _
  $region35: #{sage_conv_forward.1} parent=0 // pred_check_branch
    %1403 = sbr.rel (0) target = $region37
  $region36: #{sage_conv_forward.1} parent=0 // pred_region
    _
  $region37: #{sage_conv_forward.1} parent=0 // pred_fallthru
    _

</llo_original>
